<compile_context>
chip_gen: v7x
topology: tpu7x:2x2x1
jax: 0.10.0
libtpu: 0.0.40
codegen_flags: <defaults>
</compile_context>

<pallas_src>
import functools

import jax
import jax.numpy as jnp
import numpy as np
from jax.experimental import pallas as pl
from jax.experimental.pallas import tpu as pltpu

WIDTH = 32          # module `width`
POINT_PAD = 8       # point branch lives in one (8, .) sublane tile
FUSED = WIDTH + POINT_PAD   # 40-row fused input / stage-A/B activation slab


# --------------------------------------------------------------------------- kernel
def encoder_layer_kernel(x_ref, wab_ref, bab_ref, wcd_ref, bcd_ref,
                         w1_ref, b1_ref, out_ref):
    """One batch tile. Activations are (features, batch): batch on the 128-lane axis."""
    width = out_ref.shape[0]
    cdt = wab_ref.dtype   # MXU operand dtype (bf16 fast path / f32 exact path)
    adt = bab_ref.dtype   # bias-add + tanh + activation dtype (bf16 on v6e/v7x)

    # Stage 0: transformer1 on the point rows (rows width..width+7 of the fused input).
    # Only rows 0..2 / cols 0..2 of w1 are nonzero, so pad rows never contribute and
    # p1 rows 3..7 are exactly 0 (tanh(0) == 0).
    p1 = jnp.tanh(
        jnp.dot(w1_ref[...], x_ref[width:, :].astype(cdt),
                preferred_element_type=jnp.float32).astype(adt)
        + b1_ref[...])                                            # (8, Bt)

    # Fused 40-row slab: rows 0..31 = tmp branch, rows 32..39 = point branch.
    x = jnp.concatenate([x_ref[:width, :].astype(adt), p1], axis=0)   # (40, Bt)

    # Stage A: block-diag(transformer2, transformer1_2)
    # Stage B: transformer2_2 -> rows 0..width-4, transformer1_3 -> rows width-3..width-1
    #          => rows 0..width-1 of the stage-B output == torch.cat((t2, t1))
    for l in range(2):
        x = jnp.tanh(
            jnp.dot(wab_ref[l], x.astype(cdt),
                    preferred_element_type=jnp.float32).astype(adt)
            + bab_ref[l])                                         # (40, Bt)

    # Drop the dead point-pad rows (sublane-aligned, free slice).
    x = x[:width, :]                                              # (32, Bt) == cat(t2, t1)

    # Stages C / D: transformer3, transformer3_2 -- packed at (width, width), no pad rows.
    for l in range(2):
        x = jnp.tanh(
            jnp.dot(wcd_ref[l], x.astype(cdt),
                    preferred_element_type=jnp.float32).astype(adt)
            + bcd_ref[l])                                         # (32, Bt)

    out_ref[...] = x.astype(out_ref.dtype)


# --------------------------------------------------------------------------- params
def init_params(key, width):
    """Deterministic torch-style (out, in) Linear params."""
    def linear(key, out_f, in_f):
        k1, k2 = jax.random.split(key)
        bound = 1.0 / np.sqrt(in_f)
        w = jax.random.uniform(k1, (out_f, in_f), jnp.float32, -bound, bound)
        b = jax.random.uniform(k2, (out_f,), jnp.float32, -bound, bound)
        return w, b

    keys = jax.random.split(key, 7)
    p = {}
    p["w1"], p["b1"] = linear(keys[0], 3, 3)
    p["w1_2"], p["b1_2"] = linear(keys[1], 3, 3)
    p["w1_3"], p["b1_3"] = linear(keys[2], 3, 3)
    p["w2"], p["b2"] = linear(keys[3], width, width)
    p["w2_2"], p["b2_2"] = linear(keys[4], width - 3, width)
    p["w3"], p["b3"] = linear(keys[5], width, width)
    p["w3_2"], p["b3_2"] = linear(keys[6], width, width)
    return p


def pack_params(params, compute_dtype=jnp.bfloat16, act_dtype=jnp.bfloat16):
    """Pack the 7 Linear layers for y = W @ x on (features, batch) data.

    Returns: w1/b1 (stage 0), wAB/bAB (stages A,B on the fused 40-row slab),
    wCD/bCD (stages C,D trimmed to the 32 live rows). Weights in compute_dtype
    (MXU operands), biases in act_dtype (bias-add / tanh dtype). Called ONCE.
    """
    w = params
    width = w["w2"].shape[0]
    P = width + POINT_PAD

    # Stage 0: transformer1 (3x3), zero-padded to one (8,8) sublane tile.
    w1 = jnp.zeros((POINT_PAD, POINT_PAD), jnp.float32).at[:3, :3].set(w["w1"])
    b1 = jnp.zeros((POINT_PAD, 1), jnp.float32).at[:3, 0].set(w["b1"])

    # Stage A: block-diag(transformer2, transformer1_2).
    wA = (jnp.zeros((P, P), jnp.float32)
          .at[:width, :width].set(w["w2"])
          .at[width:width + 3, width:width + 3].set(w["w1_2"]))
    bA = (jnp.zeros((P,), jnp.float32)
          .at[:width].set(w["b2"]).at[width:width + 3].set(w["b1_2"]))

    # Stage B: transformer2_2 into rows 0..width-4 and transformer1_3 (reading the
    # point block) into rows width-3..width-1 -> rows 0..width-1 == cat(t2, t1).
    wB = (jnp.zeros((P, P), jnp.float32)
          .at[:width - 3, :width].set(w["w2_2"])
          .at[width - 3:width, width:width + 3].set(w["w1_3"]))
    bB = (jnp.zeros((P,), jnp.float32)
          .at[:width - 3].set(w["b2_2"]).at[width - 3:width].set(w["b1_3"]))

    # Stages C / D act only on the 32 live rows: no dead pad rows packed at all.
    return {
        "w1": w1.astype(compute_dtype),
        "b1": b1.astype(act_dtype),
        "wAB": jnp.stack([wA, wB]).astype(compute_dtype),                 # (2, 40, 40)
        "bAB": jnp.stack([bA, bB]).reshape(2, P, 1).astype(act_dtype),    # (2, 40, 1)
        "wCD": jnp.stack([w["w3"], w["w3_2"]]).astype(compute_dtype),     # (2, 32, 32)
        "bCD": jnp.stack([w["b3"], w["b3_2"]]).reshape(2, width, 1).astype(act_dtype),
    }


# --------------------------------------------------------------------------- tiling
def _num_tensorcores():
    """Best-effort TensorCore count of device 0 (v7x exposes 2 per chip)."""
    try:
        dev = jax.devices()[0]
        for attr in ("num_cores", "core_count"):
            v = getattr(dev, attr, None)
            if isinstance(v, int) and v > 0:
                return v
    except Exception:
        pass
    return 1


def pick_block_b(batch, num_cores=None, max_block=4096):
    """One batch tile per TensorCore when the whole batch fits (grid == #cores);
    cap tiles at `max_block` lanes for large batches so each core gets >= 2 grid
    steps and input/output DMA overlaps compute."""
    if num_cores is None:
        num_cores = _num_tensorcores()
    assert batch % 128 == 0, "batch must be a multiple of 128 lanes"
    bb = batch // max(1, num_cores)
    bb = max(128, min(bb, max_block, batch))
    bb = (bb // 128) * 128
    while batch % bb:
        bb -= 128
    return bb


# --------------------------------------------------------------------------- wrapper
@functools.partial(jax.jit, static_argnames=("block_b",))
def encoder_layer_nn_fb(x_fb, packed, *, block_b):
    """Batched EncoderLayerNN forward (eval mode), lane-dense layout.

    x_fb: (width + 8, B) fused input -- rows 0..width-1 = tmp features, rows
    width..width+2 = point xyz, rows width+3..width+7 ignored. Returns (width, B) f32.
    No layout ops on either side of the pallas_call.
    """
    P, B = x_fb.shape
    width = P - POINT_PAD
    assert P == FUSED and width % 8 == 0
    assert block_b % 128 == 0 and B % block_b == 0

    resident = lambda i: (0, 0, 0)
    return pl.pallas_call(
        encoder_layer_kernel,
        out_shape=jax.ShapeDtypeStruct((width, B), jnp.float32),
        grid_spec=pltpu.PrefetchScalarGridSpec(
            num_scalar_prefetch=0,
            grid=(B // block_b,),
            in_specs=[
                pl.BlockSpec((P, block_b), lambda i: (0, i)),            # fused input tile
                pl.BlockSpec((2, P, P), resident),                       # stage A/B weights
                pl.BlockSpec((2, P, 1), resident),                       # stage A/B biases
                pl.BlockSpec((2, width, width), resident),               # stage C/D weights
                pl.BlockSpec((2, width, 1), resident),                   # stage C/D biases
                pl.BlockSpec((POINT_PAD, POINT_PAD), lambda i: (0, 0)),  # transformer1 W
                pl.BlockSpec((POINT_PAD, 1), lambda i: (0, 0)),          # transformer1 b
            ],
            out_specs=pl.BlockSpec((width, block_b), lambda i: (0, i)),  # lane-dense out
        ),
        compiler_params=pltpu.CompilerParams(
            dimension_semantics=("parallel",)),   # batch tiles shard across v7x's 2 TCs
    )(x_fb, packed["wAB"], packed["bAB"], packed["wCD"], packed["bCD"],
      packed["w1"], packed["b1"])


# --------------------------------------------------------------------------- reference
def reference(tmp, point, params):
    """Pure-JAX batched reference mirroring the torch forward (eval mode); row-major."""
    def lin(x, w, b):
        return x @ w.T + b

    t1 = jnp.tanh(lin(point, params["w1"], params["b1"]))
    t1 = jnp.tanh(lin(t1, params["w1_2"], params["b1_2"]))
    t1 = jnp.tanh(lin(t1, params["w1_3"], params["b1_3"]))
    t2 = jnp.tanh(lin(tmp, params["w2"], params["b2"]))
    t2 = jnp.tanh(lin(t2, params["w2_2"], params["b2_2"]))
    cat = jnp.concatenate([t2, t1], axis=-1)
    r = jnp.tanh(lin(cat, params["w3"], params["b3"]))
    return jnp.tanh(lin(r, params["w3_2"], params["b3_2"]))


# --------------------------------------------------------------------------- demo
if __name__ == "__main__":
    key = jax.random.PRNGKey(0)
    k_tmp, k_point, k_params = jax.random.split(key, 3)

    B = 512
    width = WIDTH

    # Caller produces lane-dense (features, batch) data directly -> no per-call
    # transposes / pads around the kernel.
    tmp_fb = jax.random.normal(k_tmp, (width, B), jnp.float32)    # rows = tmp features
    point_fb = jax.random.normal(k_point, (3, B), jnp.float32)    # rows = xyz
    params = init_params(k_params, width)

    # One-time caller-side pack of the fused 40-row input (rows 35..39 are never read
    # by the packed weights, so the pad value is irrelevant).
    x_fb = jnp.concatenate(
        [tmp_fb, point_fb, jnp.zeros((POINT_PAD - 3, B), jnp.float32)], axis=0)

    ref = reference(tmp_fb.T, point_fb.T, params)     # (B, width) row-major reference
    block_b = pick_block_b(B)

    # 1) Exact-semantics config: f32 MXU operands, f32 bias + tanh (validates packing).
    packed_f32 = pack_params(params, compute_dtype=jnp.float32, act_dtype=jnp.float32)
    out = jax.block_until_ready(encoder_layer_nn_fb(x_fb, packed_f32, block_b=block_b))
    np.testing.assert_allclose(np.asarray(out.T), np.asarray(ref), rtol=1e-4, atol=1e-5)

    # 2) v5e fast path: bf16 MXU operands (native), f32 bias + tanh (no bf16 VPU/EUP).
    packed_v5e = pack_params(params, compute_dtype=jnp.bfloat16, act_dtype=jnp.float32)
    out = jax.block_until_ready(encoder_layer_nn_fb(x_fb, packed_v5e, block_b=block_b))
    np.testing.assert_allclose(np.asarray(out.T), np.asarray(ref), rtol=0.0, atol=4e-2)

    # 3) v6e/v7x fast path: bf16 weights, bf16 bias/tanh/activations, bf16 input
    #    (halves the binding EUP tanh work and the input HBM traffic).
    packed_bf16 = pack_params(params, compute_dtype=jnp.bfloat16, act_dtype=jnp.bfloat16)
    out = jax.block_until_ready(
        encoder_layer_nn_fb(x_fb.astype(jnp.bfloat16), packed_bf16, block_b=block_b))
    np.testing.assert_allclose(np.asarray(out.T), np.asarray(ref), rtol=0.0, atol=8e-2)

    print("KERNEL_OK")
</pallas_src>

<mosaic_0001>
module attributes {stable_mosaic.version = 11 : i64} {
  func.func @encoder_layer_kernel(%arg0: i32, %arg1: memref<40x512xf32, #tpu.memory_space<vmem>>, %arg2: memref<2x40x40xf32, #tpu.memory_space<vmem>>, %arg3: memref<2x40x1xf32, #tpu.memory_space<vmem>>, %arg4: memref<2x32x32xf32, #tpu.memory_space<vmem>>, %arg5: memref<2x32x1xf32, #tpu.memory_space<vmem>>, %arg6: memref<8x8xf32, #tpu.memory_space<vmem>>, %arg7: memref<8x1xf32, #tpu.memory_space<vmem>>, %arg8: memref<32x512xf32, #tpu.memory_space<vmem>>) attributes {dimension_semantics = [#tpu.dimension_semantics<parallel>], iteration_bounds = array<i64: 1>, scalar_prefetch = 0 : i64, scratch_operands = 0 : i64, tpu.core_type = #tpu.core_type<tc>, window_params = [{transform_indices = @transform_0, window_bounds = array<i64: 40, 512>}, {pipeline_mode = #tpu.pipeline_mode<synchronous>, transform_indices = @transform_1, window_bounds = array<i64: 2, 40, 40>}, {pipeline_mode = #tpu.pipeline_mode<synchronous>, transform_indices = @transform_2, window_bounds = array<i64: 2, 40, 1>}, {pipeline_mode = #tpu.pipeline_mode<synchronous>, transform_indices = @transform_3, window_bounds = array<i64: 2, 32, 32>}, {pipeline_mode = #tpu.pipeline_mode<synchronous>, transform_indices = @transform_4, window_bounds = array<i64: 2, 32, 1>}, {pipeline_mode = #tpu.pipeline_mode<synchronous>, transform_indices = @transform_5, window_bounds = array<i64: 8, 8>}, {pipeline_mode = #tpu.pipeline_mode<synchronous>, transform_indices = @transform_6, window_bounds = array<i64: 8, 1>}, {transform_indices = @transform_7, window_bounds = array<i64: 32, 512>}]} {
    %c0 = arith.constant 0 : index
    %c0_0 = arith.constant 0 : index
    %0 = vector.load %arg6[%c0, %c0_0] : memref<8x8xf32, #tpu.memory_space<vmem>>, vector<8x8xf32>
    %c32 = arith.constant 32 : index
    %c0_1 = arith.constant 0 : index
    %1 = vector.load %arg1[%c32, %c0_1] : memref<40x512xf32, #tpu.memory_space<vmem>>, vector<8x512xf32>
    %cst = arith.constant dense<0.000000e+00> : vector<8x512xf32>
    %2 = tpu.matmul %0, %1, %cst {dimension_numbers = #tpu.dot_dimension_numbers<[1], [0], [0], [1], [0, 0, 1, 1], [], []>} : vector<8x8xf32>, vector<8x512xf32>, vector<8x512xf32> -> vector<8x512xf32>
    %c0_2 = arith.constant 0 : index
    %c0_3 = arith.constant 0 : index
    %3 = vector.load %arg7[%c0_2, %c0_3] : memref<8x1xf32, #tpu.memory_space<vmem>>, vector<8x1xf32>
    %4 = vector.broadcast %3 : vector<8x1xf32> to vector<8x512xf32>
    %5 = arith.addf %2, %4 : vector<8x512xf32>
    %6 = math.tanh %5 : vector<8x512xf32>
    %c0_4 = arith.constant 0 : index
    %c0_5 = arith.constant 0 : index
    %7 = vector.load %arg1[%c0_4, %c0_5] : memref<40x512xf32, #tpu.memory_space<vmem>>, vector<32x512xf32>
    %8 = tpu.concatenate %7, %6 in 0 : vector<32x512xf32>, vector<8x512xf32> -> vector<40x512xf32>
    %c0_6 = arith.constant 0 : index
    %c0_7 = arith.constant 0 : index
    %c0_8 = arith.constant 0 : index
    %9 = vector.load %arg2[%c0_6, %c0_7, %c0_8] : memref<2x40x40xf32, #tpu.memory_space<vmem>>, vector<1x40x40xf32>
    %10 = vector.shape_cast %9 : vector<1x40x40xf32> to vector<40x40xf32>
    %cst_9 = arith.constant dense<0.000000e+00> : vector<40x512xf32>
    %11 = tpu.matmul %10, %8, %cst_9 {dimension_numbers = #tpu.dot_dimension_numbers<[1], [0], [0], [1], [0, 0, 1, 1], [], []>} : vector<40x40xf32>, vector<40x512xf32>, vector<40x512xf32> -> vector<40x512xf32>
    %c0_10 = arith.constant 0 : index
    %c0_11 = arith.constant 0 : index
    %c0_12 = arith.constant 0 : index
    %12 = vector.load %arg3[%c0_10, %c0_11, %c0_12] : memref<2x40x1xf32, #tpu.memory_space<vmem>>, vector<1x40x1xf32>
    %13 = vector.shape_cast %12 : vector<1x40x1xf32> to vector<40x1xf32>
    %14 = vector.broadcast %13 : vector<40x1xf32> to vector<40x512xf32>
    %15 = arith.addf %11, %14 : vector<40x512xf32>
    %16 = math.tanh %15 : vector<40x512xf32>
    %c1 = arith.constant 1 : index
    %c0_13 = arith.constant 0 : index
    %c0_14 = arith.constant 0 : index
    %17 = vector.load %arg2[%c1, %c0_13, %c0_14] : memref<2x40x40xf32, #tpu.memory_space<vmem>>, vector<1x40x40xf32>
    %18 = vector.shape_cast %17 : vector<1x40x40xf32> to vector<40x40xf32>
    %cst_15 = arith.constant dense<0.000000e+00> : vector<40x512xf32>
    %19 = tpu.matmul %18, %16, %cst_15 {dimension_numbers = #tpu.dot_dimension_numbers<[1], [0], [0], [1], [0, 0, 1, 1], [], []>} : vector<40x40xf32>, vector<40x512xf32>, vector<40x512xf32> -> vector<40x512xf32>
    %c1_16 = arith.constant 1 : index
    %c0_17 = arith.constant 0 : index
    %c0_18 = arith.constant 0 : index
    %20 = vector.load %arg3[%c1_16, %c0_17, %c0_18] : memref<2x40x1xf32, #tpu.memory_space<vmem>>, vector<1x40x1xf32>
    %21 = vector.shape_cast %20 : vector<1x40x1xf32> to vector<40x1xf32>
    %22 = vector.broadcast %21 : vector<40x1xf32> to vector<40x512xf32>
    %23 = arith.addf %19, %22 : vector<40x512xf32>
    %24 = math.tanh %23 : vector<40x512xf32>
    %25 = vector.extract_strided_slice %24 {offsets = [0, 0], sizes = [32, 512], strides = [1, 1]} : vector<40x512xf32> to vector<32x512xf32>
    %c0_19 = arith.constant 0 : index
    %c0_20 = arith.constant 0 : index
    %c0_21 = arith.constant 0 : index
    %26 = vector.load %arg4[%c0_19, %c0_20, %c0_21] : memref<2x32x32xf32, #tpu.memory_space<vmem>>, vector<1x32x32xf32>
    %27 = vector.shape_cast %26 : vector<1x32x32xf32> to vector<32x32xf32>
    %cst_22 = arith.constant dense<0.000000e+00> : vector<32x512xf32>
    %28 = tpu.matmul %27, %25, %cst_22 {dimension_numbers = #tpu.dot_dimension_numbers<[1], [0], [0], [1], [0, 0, 1, 1], [], []>} : vector<32x32xf32>, vector<32x512xf32>, vector<32x512xf32> -> vector<32x512xf32>
    %c0_23 = arith.constant 0 : index
    %c0_24 = arith.constant 0 : index
    %c0_25 = arith.constant 0 : index
    %29 = vector.load %arg5[%c0_23, %c0_24, %c0_25] : memref<2x32x1xf32, #tpu.memory_space<vmem>>, vector<1x32x1xf32>
    %30 = vector.shape_cast %29 : vector<1x32x1xf32> to vector<32x1xf32>
    %31 = vector.broadcast %30 : vector<32x1xf32> to vector<32x512xf32>
    %32 = arith.addf %28, %31 : vector<32x512xf32>
    %33 = math.tanh %32 : vector<32x512xf32>
    %c1_26 = arith.constant 1 : index
    %c0_27 = arith.constant 0 : index
    %c0_28 = arith.constant 0 : index
    %34 = vector.load %arg4[%c1_26, %c0_27, %c0_28] : memref<2x32x32xf32, #tpu.memory_space<vmem>>, vector<1x32x32xf32>
    %35 = vector.shape_cast %34 : vector<1x32x32xf32> to vector<32x32xf32>
    %cst_29 = arith.constant dense<0.000000e+00> : vector<32x512xf32>
    %36 = tpu.matmul %35, %33, %cst_29 {dimension_numbers = #tpu.dot_dimension_numbers<[1], [0], [0], [1], [0, 0, 1, 1], [], []>} : vector<32x32xf32>, vector<32x512xf32>, vector<32x512xf32> -> vector<32x512xf32>
    %c1_30 = arith.constant 1 : index
    %c0_31 = arith.constant 0 : index
    %c0_32 = arith.constant 0 : index
    %37 = vector.load %arg5[%c1_30, %c0_31, %c0_32] : memref<2x32x1xf32, #tpu.memory_space<vmem>>, vector<1x32x1xf32>
    %38 = vector.shape_cast %37 : vector<1x32x1xf32> to vector<32x1xf32>
    %39 = vector.broadcast %38 : vector<32x1xf32> to vector<32x512xf32>
    %40 = arith.addf %36, %39 : vector<32x512xf32>
    %41 = math.tanh %40 : vector<32x512xf32>
    %c0_33 = arith.constant 0 : index
    %c0_34 = arith.constant 0 : index
    %42 = vector.load %arg8[%c0_33, %c0_34] : memref<32x512xf32, #tpu.memory_space<vmem>>, vector<32x512xf32>
    tpu.vector_store %arg8[%c0_33, %c0_34], %41 {strides = array<i32>} : memref<32x512xf32, #tpu.memory_space<vmem>>, vector<32x512xf32>,
    return
  }
  func.func @transform_0(%arg0: i32) -> (i32, i32) {
    %c0_i32 = arith.constant 0 : i32
    %c0_i32_0 = arith.constant 0 : i32
    return %c0_i32, %arg0 : i32, i32
  }
  func.func @transform_1(%arg0: i32) -> (i32, i32, i32) {
    %c0_i32 = arith.constant 0 : i32
    %c0_i32_0 = arith.constant 0 : i32
    %c0_i32_1 = arith.constant 0 : i32
    %c0_i32_2 = arith.constant 0 : i32
    return %c0_i32, %c0_i32_0, %c0_i32_1 : i32, i32, i32
  }
  func.func @transform_2(%arg0: i32) -> (i32, i32, i32) {
    %c0_i32 = arith.constant 0 : i32
    %c0_i32_0 = arith.constant 0 : i32
    %c0_i32_1 = arith.constant 0 : i32
    %c0_i32_2 = arith.constant 0 : i32
    return %c0_i32, %c0_i32_0, %c0_i32_1 : i32, i32, i32
  }
  func.func @transform_3(%arg0: i32) -> (i32, i32, i32) {
    %c0_i32 = arith.constant 0 : i32
    %c0_i32_0 = arith.constant 0 : i32
    %c0_i32_1 = arith.constant 0 : i32
    %c0_i32_2 = arith.constant 0 : i32
    return %c0_i32, %c0_i32_0, %c0_i32_1 : i32, i32, i32
  }
  func.func @transform_4(%arg0: i32) -> (i32, i32, i32) {
    %c0_i32 = arith.constant 0 : i32
    %c0_i32_0 = arith.constant 0 : i32
    %c0_i32_1 = arith.constant 0 : i32
    %c0_i32_2 = arith.constant 0 : i32
    return %c0_i32, %c0_i32_0, %c0_i32_1 : i32, i32, i32
  }
  func.func @transform_5(%arg0: i32) -> (i32, i32) {
    %c0_i32 = arith.constant 0 : i32
    %c0_i32_0 = arith.constant 0 : i32
    %c0_i32_1 = arith.constant 0 : i32
    return %c0_i32, %c0_i32_0 : i32, i32
  }
  func.func @transform_6(%arg0: i32) -> (i32, i32) {
    %c0_i32 = arith.constant 0 : i32
    %c0_i32_0 = arith.constant 0 : i32
    %c0_i32_1 = arith.constant 0 : i32
    return %c0_i32, %c0_i32_0 : i32, i32
  }
  func.func @transform_7(%arg0: i32) -> (i32, i32) {
    %c0_i32 = arith.constant 0 : i32
    %c0_i32_0 = arith.constant 0 : i32
    return %c0_i32, %arg0 : i32, i32
  }
}

</mosaic_0001>

<llo_original>
// kernel: encoder_layer_nn_fb.1
$region0: #{encoder_layer_nn_fb.1}
  #allocation0 [shape = 'u32[]', space=smem, size = 0x4, offset = 0x4, fixed_abs, tag = 'smem constant byte address 0x4 - core index']
  #allocation1 [shape = 'u32[144,128]{1,0:T(1,128)}', space=vmem, size = 0x12000, scoped, tag = 'internal scratch']
  %s0 = inlined_call_operand.hbm [shape: f32[40,512], index: 0, kind: input, shape index: {}]
  %s1 = inlined_call_operand.vmem [shape: f32[2,40,40], index: 1, kind: input, shape index: {}]
  %s2 = inlined_call_operand.vmem [shape: f32[2,40,1], index: 2, kind: input, shape index: {}]
  %s3 = inlined_call_operand.vmem [shape: f32[2,32,32], index: 3, kind: input, shape index: {}]
  %s4 = inlined_call_operand.vmem [shape: f32[2,32,1], index: 4, kind: input, shape index: {}]
  %s5 = inlined_call_operand.vmem [shape: f32[8,8], index: 5, kind: input, shape index: {}]
  %s6 = inlined_call_operand.vmem [shape: f32[8,1], index: 6, kind: input, shape index: {}]
  %s7 = inlined_call_operand.hbm [shape: f32[32,512], index: 7, kind: output, shape index: {}]
  %s8 = sld [smem:[#allocation0]]
  $region42: #{encoder_layer_nn_fb.1} parent=0
    _
  %s10 = ssub.s32 1, %s8
  %s11 = scalar_select 0, %s10, %s8
  $region1: #{encoder_layer_nn_fb.1} parent=0
    #allocation2 [shape = 'u8[81920]{0}', space=vmem, size = 0x14000, scoped, tag = 'input window, operand 0, single buffered']
    #allocation3 [shape = 's32[1]{0}', space=sflag, size = 0x4, scoped, tag = 'scoped memory for encoder_layer_nn_fb.1']
    #allocation4 [shape = 's32[1]{0}', space=sflag, size = 0x4, scoped, tag = 'scoped memory for encoder_layer_nn_fb.1']
    #allocation5 [shape = 'u8[65536]{0}', space=vmem, size = 0x10000, scoped, tag = 'output window, operand 0, single buffered']
    %12 = vsyncpa [#allocation3], 0
    %13 = vsyncpa [#allocation4], 0
    // Predicated region
    $region2: #{encoder_layer_nn_fb.1} parent=1 // pred_check
      _
    $region3: #{encoder_layer_nn_fb.1} parent=1 // pred_check_branch
      %15 = sbr.rel (0) target = $region5
    $region4: #{encoder_layer_nn_fb.1} parent=1 // pred_region
      %s17 = ssub.s32 2560, 2560
      %18 = vsyncadd [#allocation3], %s17
      %s19 = sshll.u32 [#allocation2], 4
      %s20 = int_to_ptr.vmem [resolvable:$true] %s19
      %25 = dma.hbm_to_vmem [thread:$0]  %s0, 2560, %s20, [#allocation3], 512, 512, 32
    $region5: #{encoder_layer_nn_fb.1} parent=1 // pred_fallthru
      _
    // Predicated region
    $region6: #{encoder_layer_nn_fb.1} parent=1 // pred_check
      _
    $region7: #{encoder_layer_nn_fb.1} parent=1 // pred_check_branch
      %27 = sbr.rel (0) target = $region9
    $region8: #{encoder_layer_nn_fb.1} parent=1 // pred_region
      _
    $region9: #{encoder_layer_nn_fb.1} parent=1 // pred_fallthru
      _
    // Predicated region
    $region10: #{encoder_layer_nn_fb.1} parent=1 // pred_check
      _
    $region11: #{encoder_layer_nn_fb.1} parent=1 // pred_check_branch
      %29 = sbr.rel (0) target = $region13
    $region12: #{encoder_layer_nn_fb.1} parent=1 // pred_region
      _
    $region13: #{encoder_layer_nn_fb.1} parent=1 // pred_fallthru
      _
    // Predicated region
    $region14: #{encoder_layer_nn_fb.1} parent=1 // pred_check
      _
    $region15: #{encoder_layer_nn_fb.1} parent=1 // pred_check_branch
      %31 = sbr.rel (0) target = $region17
    $region16: #{encoder_layer_nn_fb.1} parent=1 // pred_region
      _
    $region17: #{encoder_layer_nn_fb.1} parent=1 // pred_fallthru
      _
    // Predicated region
    $region18: #{encoder_layer_nn_fb.1} parent=1 // pred_check
      _
    $region19: #{encoder_layer_nn_fb.1} parent=1 // pred_check_branch
      %33 = sbr.rel (0) target = $region21
    $region20: #{encoder_layer_nn_fb.1} parent=1 // pred_region
      _
    $region21: #{encoder_layer_nn_fb.1} parent=1 // pred_fallthru
      _
    // Predicated region
    $region22: #{encoder_layer_nn_fb.1} parent=1 // pred_check
      _
    $region23: #{encoder_layer_nn_fb.1} parent=1 // pred_check_branch
      %35 = sbr.rel (0) target = $region25
    $region24: #{encoder_layer_nn_fb.1} parent=1 // pred_region
      _
    $region25: #{encoder_layer_nn_fb.1} parent=1 // pred_fallthru
      _
    // Predicated region
    $region26: #{encoder_layer_nn_fb.1} parent=1 // pred_check
      _
    $region27: #{encoder_layer_nn_fb.1} parent=1 // pred_check_branch
      %37 = sbr.rel (0) target = $region29
    $region28: #{encoder_layer_nn_fb.1} parent=1 // pred_region
      _
    $region29: #{encoder_layer_nn_fb.1} parent=1 // pred_fallthru
      _
    // Predicated region
    $region30: #{encoder_layer_nn_fb.1} parent=1 // pred_check
      _
    $region31: #{encoder_layer_nn_fb.1} parent=1 // pred_check_branch
      %39 = sbr.rel (0) target = $region33
    $region32: #{encoder_layer_nn_fb.1} parent=1 // pred_region
      %40 = dma.done [#allocation3], 2560
    $region33: #{encoder_layer_nn_fb.1} parent=1 // pred_fallthru
      _
    %v41 = vld [vmem:[%s5] sm:$0xff]
    %v42 = vld [vmem:[#allocation2 + $0x80] sm:$0xff]
    %v43 = vld [vmem:[#allocation2 + $0x88] sm:$0xff]
    %v44 = vld [vmem:[#allocation2 + $0x90] sm:$0xff]
    %v45 = vld [vmem:[#allocation2 + $0x98] sm:$0xff]
    %v46 = vld [vmem:[%s6] sm:$0xff]
    %48 = vset.pattern.permute.xlu0 0
    %49 = vperm.xlu0 %48, %v46
    %v50 = vpop.permute.xlu0 %49
    %vm52 = vcmask 64512
    %v54 = vsel %vm52, %v41, 0
    %56 = vmatprep.subr.mxu0 %v43
    %57 = vmatpush1.msra.mxu0 %v42
    %58 = vmatprep.subr.mxu0 0.0
    %59 = vmatpush1.msra.mxu0 0.0
    %60 = vmatprep.subr.mxu0 0.0
    %61 = vmatpush1.msra.mxu0 0.0
    %62 = vmatprep.subr.mxu0 0.0
    %63 = vmatpush1.msra.mxu0 0.0
    %64 = vmatprep.subr.mxu0 0.0
    %65 = vmatpush1.msra.mxu0 0.0
    %66 = vmatprep.subr.mxu0 0.0
    %67 = vmatpush1.msra.mxu0 0.0
    %68 = vmatprep.subr.mxu0 0.0
    %69 = vmatpush1.msra.mxu0 0.0
    %70 = vmatprep.subr.mxu0 0.0
    %71 = vmatpush1.msra.mxu0 0.0
    %72 = vmatprep.subr.mxu0 0.0
    %73 = vmatpush1.msra.mxu0 0.0
    %74 = vmatprep.subr.mxu0 0.0
    %75 = vmatpush1.msra.mxu0 0.0
    %76 = vmatprep.subr.mxu0 0.0
    %77 = vmatpush1.msra.mxu0 0.0
    %78 = vmatprep.subr.mxu0 0.0
    %79 = vmatpush1.msra.mxu0 0.0
    %80 = vmatprep.subr.mxu0 0.0
    %81 = vmatpush1.msra.mxu0 0.0
    %82 = vmatprep.subr.mxu0 0.0
    %83 = vmatpush1.msra.mxu0 0.0
    %84 = vmatprep.subr.mxu0 0.0
    %85 = vmatpush1.msra.mxu0 0.0
    %86 = vmatprep.subr.mxu0 0.0
    %87 = vmatpush1.msra.mxu0 0.0
    %88 = vmatprep.subr.mxu0 0.0
    %89 = vmatpush1.msra.mxu0 0.0
    %90 = vmatprep.subr.mxu0 0.0
    %91 = vmatpush1.msra.mxu0 0.0
    %92 = vmatprep.subr.mxu0 0.0
    %93 = vmatpush1.msra.mxu0 0.0
    %94 = vmatprep.subr.mxu0 0.0
    %95 = vmatpush1.msra.mxu0 0.0
    %96 = vmatprep.subr.mxu0 0.0
    %97 = vmatpush1.msra.mxu0 0.0
    %98 = vmatprep.subr.mxu0 0.0
    %99 = vmatpush1.msra.mxu0 0.0
    %100 = vmatprep.subr.mxu0 0.0
    %101 = vmatpush1.msra.mxu0 0.0
    %102 = vmatprep.subr.mxu0 0.0
    %103 = vmatpush1.msra.mxu0 0.0
    %104 = vmatprep.subr.mxu0 0.0
    %105 = vmatpush1.msra.mxu0 0.0
    %106 = vmatprep.subr.mxu0 0.0
    %107 = vmatpush1.msra.mxu0 0.0
    %108 = vmatprep.subr.mxu0 0.0
    %109 = vmatpush1.msra.mxu0 0.0
    %110 = vmatprep.subr.mxu0 0.0
    %111 = vmatpush1.msra.mxu0 0.0
    %112 = vmatprep.subr.mxu0 0.0
    %113 = vmatpush1.msra.mxu0 0.0
    %114 = vmatprep.subr.mxu0 0.0
    %115 = vmatpush1.msra.mxu0 0.0
    %116 = vmatprep.subr.mxu0 0.0
    %117 = vmatpush1.msra.mxu0 0.0
    %118 = vmatprep.subr.mxu0 0.0
    %119 = vmatpush1.msra.mxu0 0.0
    %120 = vmatprep.mubr.f32.mxu0 0.0
    %121 = vmatmul.mubr.f32.gmra.mrb[0].mxu0 %v54
    %v122 = vpop.f32.mrb[0].mxu0
    %v123 = vadd.f32 %v50, %v122
    %v124 = vpop.f32.mrb[0].mxu0
    %v125 = vadd.f32 %v50, %v124
    %126 = vdwg.mxu0
    %127 = vmatprep.subr.mxu0 %v45
    %128 = vmatpush1.msra.mxu0 %v44
    %129 = vmatprep.subr.mxu0 0.0
    %130 = vmatpush1.msra.mxu0 0.0
    %131 = vmatprep.subr.mxu0 0.0
    %132 = vmatpush1.msra.mxu0 0.0
    %133 = vmatprep.subr.mxu0 0.0
    %134 = vmatpush1.msra.mxu0 0.0
    %135 = vmatprep.subr.mxu0 0.0
    %136 = vmatpush1.msra.mxu0 0.0
    %137 = vmatprep.subr.mxu0 0.0
    %138 = vmatpush1.msra.mxu0 0.0
    %139 = vmatprep.subr.mxu0 0.0
    %140 = vmatpush1.msra.mxu0 0.0
    %141 = vmatprep.subr.mxu0 0.0
    %142 = vmatpush1.msra.mxu0 0.0
    %143 = vmatprep.subr.mxu0 0.0
    %144 = vmatpush1.msra.mxu0 0.0
    %145 = vmatprep.subr.mxu0 0.0
    %146 = vmatpush1.msra.mxu0 0.0
    %147 = vmatprep.subr.mxu0 0.0
    %148 = vmatpush1.msra.mxu0 0.0
    %149 = vmatprep.subr.mxu0 0.0
    %150 = vmatpush1.msra.mxu0 0.0
    %151 = vmatprep.subr.mxu0 0.0
    %152 = vmatpush1.msra.mxu0 0.0
    %153 = vmatprep.subr.mxu0 0.0
    %154 = vmatpush1.msra.mxu0 0.0
    %155 = vmatprep.subr.mxu0 0.0
    %156 = vmatpush1.msra.mxu0 0.0
    %157 = vmatprep.subr.mxu0 0.0
    %158 = vmatpush1.msra.mxu0 0.0
    %159 = vmatprep.subr.mxu0 0.0
    %160 = vmatpush1.msra.mxu0 0.0
    %161 = vmatprep.subr.mxu0 0.0
    %162 = vmatpush1.msra.mxu0 0.0
    %163 = vmatprep.subr.mxu0 0.0
    %164 = vmatpush1.msra.mxu0 0.0
    %165 = vmatprep.subr.mxu0 0.0
    %166 = vmatpush1.msra.mxu0 0.0
    %167 = vmatprep.subr.mxu0 0.0
    %168 = vmatpush1.msra.mxu0 0.0
    %169 = vmatprep.subr.mxu0 0.0
    %170 = vmatpush1.msra.mxu0 0.0
    %171 = vmatprep.subr.mxu0 0.0
    %172 = vmatpush1.msra.mxu0 0.0
    %173 = vmatprep.subr.mxu0 0.0
    %174 = vmatpush1.msra.mxu0 0.0
    %175 = vmatprep.subr.mxu0 0.0
    %176 = vmatpush1.msra.mxu0 0.0
    %177 = vmatprep.subr.mxu0 0.0
    %178 = vmatpush1.msra.mxu0 0.0
    %179 = vmatprep.subr.mxu0 0.0
    %180 = vmatpush1.msra.mxu0 0.0
    %181 = vmatprep.subr.mxu0 0.0
    %182 = vmatpush1.msra.mxu0 0.0
    %183 = vmatprep.subr.mxu0 0.0
    %184 = vmatpush1.msra.mxu0 0.0
    %185 = vmatprep.subr.mxu0 0.0
    %186 = vmatpush1.msra.mxu0 0.0
    %187 = vmatprep.subr.mxu0 0.0
    %188 = vmatpush1.msra.mxu0 0.0
    %189 = vmatprep.subr.mxu0 0.0
    %190 = vmatpush1.msra.mxu0 0.0
    %191 = vmatprep.mubr.f32.mxu0 0.0
    %192 = vmatmul.mubr.f32.gmra.mrb[0].mxu0 %v54
    %v193 = vpop.f32.mrb[0].mxu0
    %v194 = vadd.f32 %v50, %v193
    %v195 = vpop.f32.mrb[0].mxu0
    %v196 = vadd.f32 %v50, %v195
    %197 = vdwg.mxu0
    %v198 = vtanh.pop %v123
    %v199 = vtanh.pop %v125
    %v200 = vtanh.pop %v194
    %v201 = vtanh.pop %v196
    %v202 = vld [vmem:[#allocation2] sm:$0xff]
    %v203 = vld [vmem:[#allocation2 + $0x8] sm:$0xff]
    %v204 = vld [vmem:[#allocation2 + $0x10] sm:$0xff]
    %v205 = vld [vmem:[#allocation2 + $0x18] sm:$0xff]
    %v206 = vld [vmem:[#allocation2 + $0x20] sm:$0xff]
    %v207 = vld [vmem:[#allocation2 + $0x28] sm:$0xff]
    %v208 = vld [vmem:[#allocation2 + $0x30] sm:$0xff]
    %v209 = vld [vmem:[#allocation2 + $0x38] sm:$0xff]
    %v210 = vld [vmem:[#allocation2 + $0x40] sm:$0xff]
    %v211 = vld [vmem:[#allocation2 + $0x48] sm:$0xff]
    %v212 = vld [vmem:[#allocation2 + $0x50] sm:$0xff]
    %v213 = vld [vmem:[#allocation2 + $0x58] sm:$0xff]
    %v214 = vld [vmem:[#allocation2 + $0x60] sm:$0xff]
    %v215 = vld [vmem:[#allocation2 + $0x68] sm:$0xff]
    %v216 = vld [vmem:[#allocation2 + $0x70] sm:$0xff]
    %v217 = vld [vmem:[#allocation2 + $0x78] sm:$0xff]
    %v218 = vld [vmem:[%s1] sm:$0xff]
    %v219 = vld [vmem:[%s1 + $0x8] sm:$0xff]
    %v220 = vld [vmem:[%s1 + $0x10] sm:$0xff]
    %v221 = vld [vmem:[%s1 + $0x18] sm:$0xff]
    %v222 = vld [vmem:[%s1 + $0x20] sm:$0xff]
    %v223 = vld [vmem:[%s2] sm:$0xff]
    %v224 = vld [vmem:[%s2 + $0x8] sm:$0xff]
    %v225 = vld [vmem:[%s2 + $0x10] sm:$0xff]
    %v226 = vld [vmem:[%s2 + $0x18] sm:$0xff]
    %v227 = vld [vmem:[%s2 + $0x20] sm:$0xff]
    %229 = vset.pattern.permute.xlu0 0
    %230 = vperm.xlu0 %229, %v223
    %v231 = vpop.permute.xlu0 %230
    %234 = vset.pattern.permute.xlu0 0
    %235 = vperm.xlu0 %234, %v224
    %v236 = vpop.permute.xlu0 %235
    %239 = vset.pattern.permute.xlu0 0
    %240 = vperm.xlu0 %239, %v225
    %v241 = vpop.permute.xlu0 %240
    %244 = vset.pattern.permute.xlu0 0
    %245 = vperm.xlu0 %244, %v226
    %v246 = vpop.permute.xlu0 %245
    %249 = vset.pattern.permute.xlu0 0
    %250 = vperm.xlu0 %249, %v227
    %v251 = vpop.permute.xlu0 %250
    %vm253 = vcmask 326656
    %v255 = vsel %vm253, %v218, 0
    %v258 = vsel %vm253, %v219, 0
    %v261 = vsel %vm253, %v220, 0
    %v264 = vsel %vm253, %v221, 0
    %v267 = vsel %vm253, %v222, 0
    %269 = vmatprep.subr.mxu0 %v203
    %270 = vmatpush1.msra.mxu0 %v202
    %271 = vmatprep.subr.mxu0 %v207
    %272 = vmatpush1.msra.mxu0 %v206
    %273 = vmatprep.subr.mxu0 %v211
    %274 = vmatpush1.msra.mxu0 %v210
    %275 = vmatprep.subr.mxu0 %v215
    %276 = vmatpush1.msra.mxu0 %v214
    %277 = vmatprep.subr.mxu0 %v199
    %278 = vmatpush1.msra.mxu0 %v198
    %279 = vmatprep.subr.mxu0 0.0
    %280 = vmatpush1.msra.mxu0 0.0
    %281 = vmatprep.subr.mxu0 0.0
    %282 = vmatpush1.msra.mxu0 0.0
    %283 = vmatprep.subr.mxu0 0.0
    %284 = vmatpush1.msra.mxu0 0.0
    %285 = vmatprep.subr.mxu0 0.0
    %286 = vmatpush1.msra.mxu0 0.0
    %287 = vmatprep.subr.mxu0 0.0
    %288 = vmatpush1.msra.mxu0 0.0
    %289 = vmatprep.subr.mxu0 0.0
    %290 = vmatpush1.msra.mxu0 0.0
    %291 = vmatprep.subr.mxu0 0.0
    %292 = vmatpush1.msra.mxu0 0.0
    %293 = vmatprep.subr.mxu0 0.0
    %294 = vmatpush1.msra.mxu0 0.0
    %295 = vmatprep.subr.mxu0 0.0
    %296 = vmatpush1.msra.mxu0 0.0
    %297 = vmatprep.subr.mxu0 0.0
    %298 = vmatpush1.msra.mxu0 0.0
    %299 = vmatprep.subr.mxu0 0.0
    %300 = vmatpush1.msra.mxu0 0.0
    %301 = vmatprep.subr.mxu0 0.0
    %302 = vmatpush1.msra.mxu0 0.0
    %303 = vmatprep.subr.mxu0 0.0
    %304 = vmatpush1.msra.mxu0 0.0
    %305 = vmatprep.subr.mxu0 0.0
    %306 = vmatpush1.msra.mxu0 0.0
    %307 = vmatprep.subr.mxu0 0.0
    %308 = vmatpush1.msra.mxu0 0.0
    %309 = vmatprep.subr.mxu0 0.0
    %310 = vmatpush1.msra.mxu0 0.0
    %311 = vmatprep.subr.mxu0 0.0
    %312 = vmatpush1.msra.mxu0 0.0
    %313 = vmatprep.subr.mxu0 0.0
    %314 = vmatpush1.msra.mxu0 0.0
    %315 = vmatprep.subr.mxu0 0.0
    %316 = vmatpush1.msra.mxu0 0.0
    %317 = vmatprep.subr.mxu0 0.0
    %318 = vmatpush1.msra.mxu0 0.0
    %319 = vmatprep.subr.mxu0 0.0
    %320 = vmatpush1.msra.mxu0 0.0
    %321 = vmatprep.subr.mxu0 0.0
    %322 = vmatpush1.msra.mxu0 0.0
    %323 = vmatprep.subr.mxu0 0.0
    %324 = vmatpush1.msra.mxu0 0.0
    %325 = vmatprep.subr.mxu0 0.0
    %326 = vmatpush1.msra.mxu0 0.0
    %327 = vmatprep.subr.mxu0 0.0
    %328 = vmatpush1.msra.mxu0 0.0
    %329 = vmatprep.subr.mxu0 0.0
    %330 = vmatpush1.msra.mxu0 0.0
    %331 = vmatprep.subr.mxu0 0.0
    %332 = vmatpush1.msra.mxu0 0.0
    %333 = vmatprep.mubr.f32.mxu0 0.0
    %334 = vmatmul.mubr.f32.gmra.mrb[0].mxu0 %v255
    %v335 = vpop.f32.mrb[0].mxu0
    %v336 = vadd.f32 %v231, %v335
    %v337 = vpop.f32.mrb[0].mxu0
    %v338 = vadd.f32 %v231, %v337
    %339 = vmatprep.mubr.f32.mxu0 0.0
    %340 = vmatmul.mubr.f32.gmra.mrb[0].mxu0 %v258
    %v341 = vpop.f32.mrb[0].mxu0
    %v342 = vadd.f32 %v236, %v341
    %v343 = vpop.f32.mrb[0].mxu0
    %v344 = vadd.f32 %v236, %v343
    %345 = vmatprep.mubr.f32.mxu0 0.0
    %346 = vmatmul.mubr.f32.gmra.mrb[0].mxu0 %v261
    %v347 = vpop.f32.mrb[0].mxu0
    %v348 = vadd.f32 %v241, %v347
    %v349 = vpop.f32.mrb[0].mxu0
    %v350 = vadd.f32 %v241, %v349
    %351 = vmatprep.mubr.f32.mxu0 0.0
    %352 = vmatmul.mubr.f32.gmra.mrb[0].mxu0 %v264
    %v353 = vpop.f32.mrb[0].mxu0
    %v354 = vadd.f32 %v246, %v353
    %v355 = vpop.f32.mrb[0].mxu0
    %v356 = vadd.f32 %v246, %v355
    %357 = vmatprep.mubr.f32.mxu0 0.0
    %358 = vmatmul.mubr.f32.gmra.mrb[0].mxu0 %v267
    %v359 = vpop.f32.mrb[0].mxu0
    %v360 = vadd.f32 %v251, %v359
    %v361 = vpop.f32.mrb[0].mxu0
    %v362 = vadd.f32 %v251, %v361
    %363 = vdwg.mxu0
    %364 = vmatprep.subr.mxu0 %v205
    %365 = vmatpush1.msra.mxu0 %v204
    %366 = vmatprep.subr.mxu0 %v209
    %367 = vmatpush1.msra.mxu0 %v208
    %368 = vmatprep.subr.mxu0 %v213
    %369 = vmatpush1.msra.mxu0 %v212
    %370 = vmatprep.subr.mxu0 %v217
    %371 = vmatpush1.msra.mxu0 %v216
    %372 = vmatprep.subr.mxu0 %v201
    %373 = vmatpush1.msra.mxu0 %v200
    %374 = vmatprep.subr.mxu0 0.0
    %375 = vmatpush1.msra.mxu0 0.0
    %376 = vmatprep.subr.mxu0 0.0
    %377 = vmatpush1.msra.mxu0 0.0
    %378 = vmatprep.subr.mxu0 0.0
    %379 = vmatpush1.msra.mxu0 0.0
    %380 = vmatprep.subr.mxu0 0.0
    %381 = vmatpush1.msra.mxu0 0.0
    %382 = vmatprep.subr.mxu0 0.0
    %383 = vmatpush1.msra.mxu0 0.0
    %384 = vmatprep.subr.mxu0 0.0
    %385 = vmatpush1.msra.mxu0 0.0
    %386 = vmatprep.subr.mxu0 0.0
    %387 = vmatpush1.msra.mxu0 0.0
    %388 = vmatprep.subr.mxu0 0.0
    %389 = vmatpush1.msra.mxu0 0.0
    %390 = vmatprep.subr.mxu0 0.0
    %391 = vmatpush1.msra.mxu0 0.0
    %392 = vmatprep.subr.mxu0 0.0
    %393 = vmatpush1.msra.mxu0 0.0
    %394 = vmatprep.subr.mxu0 0.0
    %395 = vmatpush1.msra.mxu0 0.0
    %396 = vmatprep.subr.mxu0 0.0
    %397 = vmatpush1.msra.mxu0 0.0
    %398 = vmatprep.subr.mxu0 0.0
    %399 = vmatpush1.msra.mxu0 0.0
    %400 = vmatprep.subr.mxu0 0.0
    %401 = vmatpush1.msra.mxu0 0.0
    %402 = vmatprep.subr.mxu0 0.0
    %403 = vmatpush1.msra.mxu0 0.0
    %404 = vmatprep.subr.mxu0 0.0
    %405 = vmatpush1.msra.mxu0 0.0
    %406 = vmatprep.subr.mxu0 0.0
    %407 = vmatpush1.msra.mxu0 0.0
    %408 = vmatprep.subr.mxu0 0.0
    %409 = vmatpush1.msra.mxu0 0.0
    %410 = vmatprep.subr.mxu0 0.0
    %411 = vmatpush1.msra.mxu0 0.0
    %412 = vmatprep.subr.mxu0 0.0
    %413 = vmatpush1.msra.mxu0 0.0
    %414 = vmatprep.subr.mxu0 0.0
    %415 = vmatpush1.msra.mxu0 0.0
    %416 = vmatprep.subr.mxu0 0.0
    %417 = vmatpush1.msra.mxu0 0.0
    %418 = vmatprep.subr.mxu0 0.0
    %419 = vmatpush1.msra.mxu0 0.0
    %420 = vmatprep.subr.mxu0 0.0
    %421 = vmatpush1.msra.mxu0 0.0
    %422 = vmatprep.subr.mxu0 0.0
    %423 = vmatpush1.msra.mxu0 0.0
    %424 = vmatprep.subr.mxu0 0.0
    %425 = vmatpush1.msra.mxu0 0.0
    %426 = vmatprep.subr.mxu0 0.0
    %427 = vmatpush1.msra.mxu0 0.0
    %428 = vmatprep.mubr.f32.mxu0 0.0
    %429 = vmatmul.mubr.f32.gmra.mrb[0].mxu0 %v255
    %v430 = vpop.f32.mrb[0].mxu0
    %v431 = vadd.f32 %v231, %v430
    %v432 = vpop.f32.mrb[0].mxu0
    %v433 = vadd.f32 %v231, %v432
    %434 = vmatprep.mubr.f32.mxu0 0.0
    %435 = vmatmul.mubr.f32.gmra.mrb[0].mxu0 %v258
    %v436 = vpop.f32.mrb[0].mxu0
    %v437 = vadd.f32 %v236, %v436
    %v438 = vpop.f32.mrb[0].mxu0
    %v439 = vadd.f32 %v236, %v438
    %440 = vmatprep.mubr.f32.mxu0 0.0
    %441 = vmatmul.mubr.f32.gmra.mrb[0].mxu0 %v261
    %v442 = vpop.f32.mrb[0].mxu0
    %v443 = vadd.f32 %v241, %v442
    %v444 = vpop.f32.mrb[0].mxu0
    %v445 = vadd.f32 %v241, %v444
    %446 = vmatprep.mubr.f32.mxu0 0.0
    %447 = vmatmul.mubr.f32.gmra.mrb[0].mxu0 %v264
    %v448 = vpop.f32.mrb[0].mxu0
    %v449 = vadd.f32 %v246, %v448
    %v450 = vpop.f32.mrb[0].mxu0
    %v451 = vadd.f32 %v246, %v450
    %452 = vmatprep.mubr.f32.mxu0 0.0
    %453 = vmatmul.mubr.f32.gmra.mrb[0].mxu0 %v267
    %v454 = vpop.f32.mrb[0].mxu0
    %v455 = vadd.f32 %v251, %v454
    %v456 = vpop.f32.mrb[0].mxu0
    %v457 = vadd.f32 %v251, %v456
    %458 = vdwg.mxu0
    %v459 = vtanh.pop %v336
    %v460 = vtanh.pop %v338
    %v461 = vtanh.pop %v431
    %v462 = vtanh.pop %v433
    %v463 = vtanh.pop %v342
    %v464 = vtanh.pop %v344
    %v465 = vtanh.pop %v437
    %v466 = vtanh.pop %v439
    %v467 = vtanh.pop %v348
    %v468 = vtanh.pop %v350
    %v469 = vtanh.pop %v443
    %v470 = vtanh.pop %v445
    %v471 = vtanh.pop %v354
    %v472 = vtanh.pop %v356
    %v473 = vtanh.pop %v449
    %v474 = vtanh.pop %v451
    %v475 = vtanh.pop %v360
    %v476 = vtanh.pop %v362
    %v477 = vtanh.pop %v455
    %v478 = vtanh.pop %v457
    %s479 = scalar_lea.vmem %s1, 40
    %v480 = vld [vmem:[%s479] sm:$0xff]
    %v481 = vld [vmem:[%s479 + $0x8] sm:$0xff]
    %v482 = vld [vmem:[%s479 + $0x10] sm:$0xff]
    %v483 = vld [vmem:[%s479 + $0x18] sm:$0xff]
    %v484 = vld [vmem:[%s479 + $0x20] sm:$0xff]
    %s485 = scalar_lea.vmem %s2, 40
    %v486 = vld [vmem:[%s485] sm:$0xff]
    %v487 = vld [vmem:[%s485 + $0x8] sm:$0xff]
    %v488 = vld [vmem:[%s485 + $0x10] sm:$0xff]
    %v489 = vld [vmem:[%s485 + $0x18] sm:$0xff]
    %v490 = vld [vmem:[%s485 + $0x20] sm:$0xff]
    %492 = vset.pattern.permute.xlu0 0
    %493 = vperm.xlu0 %492, %v486
    %v494 = vpop.permute.xlu0 %493
    %497 = vset.pattern.permute.xlu0 0
    %498 = vperm.xlu0 %497, %v487
    %v499 = vpop.permute.xlu0 %498
    %502 = vset.pattern.permute.xlu0 0
    %503 = vperm.xlu0 %502, %v488
    %v504 = vpop.permute.xlu0 %503
    %507 = vset.pattern.permute.xlu0 0
    %508 = vperm.xlu0 %507, %v489
    %v509 = vpop.permute.xlu0 %508
    %512 = vset.pattern.permute.xlu0 0
    %513 = vperm.xlu0 %512, %v490
    %v514 = vpop.permute.xlu0 %513
    %v516 = vsel %vm253, %v480, 0
    %v519 = vsel %vm253, %v481, 0
    %v522 = vsel %vm253, %v482, 0
    %v525 = vsel %vm253, %v483, 0
    %v528 = vsel %vm253, %v484, 0
    %530 = vmatprep.subr.mxu0 %v460
    %531 = vmatpush1.msra.mxu0 %v459
    %532 = vmatprep.subr.mxu0 %v464
    %533 = vmatpush1.msra.mxu0 %v463
    %534 = vmatprep.subr.mxu0 %v468
    %535 = vmatpush1.msra.mxu0 %v467
    %536 = vmatprep.subr.mxu0 %v472
    %537 = vmatpush1.msra.mxu0 %v471
    %538 = vmatprep.subr.mxu0 %v476
    %539 = vmatpush1.msra.mxu0 %v475
    %540 = vmatprep.subr.mxu0 0.0
    %541 = vmatpush1.msra.mxu0 0.0
    %542 = vmatprep.subr.mxu0 0.0
    %543 = vmatpush1.msra.mxu0 0.0
    %544 = vmatprep.subr.mxu0 0.0
    %545 = vmatpush1.msra.mxu0 0.0
    %546 = vmatprep.subr.mxu0 0.0
    %547 = vmatpush1.msra.mxu0 0.0
    %548 = vmatprep.subr.mxu0 0.0
    %549 = vmatpush1.msra.mxu0 0.0
    %550 = vmatprep.subr.mxu0 0.0
    %551 = vmatpush1.msra.mxu0 0.0
    %552 = vmatprep.subr.mxu0 0.0
    %553 = vmatpush1.msra.mxu0 0.0
    %554 = vmatprep.subr.mxu0 0.0
    %555 = vmatpush1.msra.mxu0 0.0
    %556 = vmatprep.subr.mxu0 0.0
    %557 = vmatpush1.msra.mxu0 0.0
    %558 = vmatprep.subr.mxu0 0.0
    %559 = vmatpush1.msra.mxu0 0.0
    %560 = vmatprep.subr.mxu0 0.0
    %561 = vmatpush1.msra.mxu0 0.0
    %562 = vmatprep.subr.mxu0 0.0
    %563 = vmatpush1.msra.mxu0 0.0
    %564 = vmatprep.subr.mxu0 0.0
    %565 = vmatpush1.msra.mxu0 0.0
    %566 = vmatprep.subr.mxu0 0.0
    %567 = vmatpush1.msra.mxu0 0.0
    %568 = vmatprep.subr.mxu0 0.0
    %569 = vmatpush1.msra.mxu0 0.0
    %570 = vmatprep.subr.mxu0 0.0
    %571 = vmatpush1.msra.mxu0 0.0
    %572 = vmatprep.subr.mxu0 0.0
    %573 = vmatpush1.msra.mxu0 0.0
    %574 = vmatprep.subr.mxu0 0.0
    %575 = vmatpush1.msra.mxu0 0.0
    %576 = vmatprep.subr.mxu0 0.0
    %577 = vmatpush1.msra.mxu0 0.0
    %578 = vmatprep.subr.mxu0 0.0
    %579 = vmatpush1.msra.mxu0 0.0
    %580 = vmatprep.subr.mxu0 0.0
    %581 = vmatpush1.msra.mxu0 0.0
    %582 = vmatprep.subr.mxu0 0.0
    %583 = vmatpush1.msra.mxu0 0.0
    %584 = vmatprep.subr.mxu0 0.0
    %585 = vmatpush1.msra.mxu0 0.0
    %586 = vmatprep.subr.mxu0 0.0
    %587 = vmatpush1.msra.mxu0 0.0
    %588 = vmatprep.subr.mxu0 0.0
    %589 = vmatpush1.msra.mxu0 0.0
    %590 = vmatprep.subr.mxu0 0.0
    %591 = vmatpush1.msra.mxu0 0.0
    %592 = vmatprep.subr.mxu0 0.0
    %593 = vmatpush1.msra.mxu0 0.0
    %594 = vmatprep.mubr.f32.mxu0 0.0
    %595 = vmatmul.mubr.f32.gmra.mrb[0].mxu0 %v516
    %v596 = vpop.f32.mrb[0].mxu0
    %v597 = vadd.f32 %v494, %v596
    %v598 = vpop.f32.mrb[0].mxu0
    %v599 = vadd.f32 %v494, %v598
    %600 = vmatprep.mubr.f32.mxu0 0.0
    %601 = vmatmul.mubr.f32.gmra.mrb[0].mxu0 %v519
    %v602 = vpop.f32.mrb[0].mxu0
    %v603 = vadd.f32 %v499, %v602
    %v604 = vpop.f32.mrb[0].mxu0
    %v605 = vadd.f32 %v499, %v604
    %606 = vmatprep.mubr.f32.mxu0 0.0
    %607 = vmatmul.mubr.f32.gmra.mrb[0].mxu0 %v522
    %v608 = vpop.f32.mrb[0].mxu0
    %v609 = vadd.f32 %v504, %v608
    %v610 = vpop.f32.mrb[0].mxu0
    %v611 = vadd.f32 %v504, %v610
    %612 = vmatprep.mubr.f32.mxu0 0.0
    %613 = vmatmul.mubr.f32.gmra.mrb[0].mxu0 %v525
    %v614 = vpop.f32.mrb[0].mxu0
    %v615 = vadd.f32 %v509, %v614
    %v616 = vpop.f32.mrb[0].mxu0
    %v617 = vadd.f32 %v509, %v616
    %618 = vmatprep.mubr.f32.mxu0 0.0
    %619 = vmatmul.mubr.f32.gmra.mrb[0].mxu0 %v528
    %v620 = vpop.f32.mrb[0].mxu0
    %v621 = vpop.f32.mrb[0].mxu0
    %622 = vdwg.mxu0
    %623 = vmatprep.subr.mxu0 %v462
    %624 = vmatpush1.msra.mxu0 %v461
    %625 = vmatprep.subr.mxu0 %v466
    %626 = vmatpush1.msra.mxu0 %v465
    %627 = vmatprep.subr.mxu0 %v470
    %628 = vmatpush1.msra.mxu0 %v469
    %629 = vmatprep.subr.mxu0 %v474
    %630 = vmatpush1.msra.mxu0 %v473
    %631 = vmatprep.subr.mxu0 %v478
    %632 = vmatpush1.msra.mxu0 %v477
    %633 = vmatprep.subr.mxu0 0.0
    %634 = vmatpush1.msra.mxu0 0.0
    %635 = vmatprep.subr.mxu0 0.0
    %636 = vmatpush1.msra.mxu0 0.0
    %637 = vmatprep.subr.mxu0 0.0
    %638 = vmatpush1.msra.mxu0 0.0
    %639 = vmatprep.subr.mxu0 0.0
    %640 = vmatpush1.msra.mxu0 0.0
    %641 = vmatprep.subr.mxu0 0.0
    %642 = vmatpush1.msra.mxu0 0.0
    %643 = vmatprep.subr.mxu0 0.0
    %644 = vmatpush1.msra.mxu0 0.0
    %645 = vmatprep.subr.mxu0 0.0
    %646 = vmatpush1.msra.mxu0 0.0
    %647 = vmatprep.subr.mxu0 0.0
    %648 = vmatpush1.msra.mxu0 0.0
    %649 = vmatprep.subr.mxu0 0.0
    %650 = vmatpush1.msra.mxu0 0.0
    %651 = vmatprep.subr.mxu0 0.0
    %652 = vmatpush1.msra.mxu0 0.0
    %653 = vmatprep.subr.mxu0 0.0
    %654 = vmatpush1.msra.mxu0 0.0
    %655 = vmatprep.subr.mxu0 0.0
    %656 = vmatpush1.msra.mxu0 0.0
    %657 = vmatprep.subr.mxu0 0.0
    %658 = vmatpush1.msra.mxu0 0.0
    %659 = vmatprep.subr.mxu0 0.0
    %660 = vmatpush1.msra.mxu0 0.0
    %661 = vmatprep.subr.mxu0 0.0
    %662 = vmatpush1.msra.mxu0 0.0
    %663 = vmatprep.subr.mxu0 0.0
    %664 = vmatpush1.msra.mxu0 0.0
    %665 = vmatprep.subr.mxu0 0.0
    %666 = vmatpush1.msra.mxu0 0.0
    %667 = vmatprep.subr.mxu0 0.0
    %668 = vmatpush1.msra.mxu0 0.0
    %669 = vmatprep.subr.mxu0 0.0
    %670 = vmatpush1.msra.mxu0 0.0
    %671 = vmatprep.subr.mxu0 0.0
    %672 = vmatpush1.msra.mxu0 0.0
    %673 = vmatprep.subr.mxu0 0.0
    %674 = vmatpush1.msra.mxu0 0.0
    %675 = vmatprep.subr.mxu0 0.0
    %676 = vmatpush1.msra.mxu0 0.0
    %677 = vmatprep.subr.mxu0 0.0
    %678 = vmatpush1.msra.mxu0 0.0
    %679 = vmatprep.subr.mxu0 0.0
    %680 = vmatpush1.msra.mxu0 0.0
    %681 = vmatprep.subr.mxu0 0.0
    %682 = vmatpush1.msra.mxu0 0.0
    %683 = vmatprep.subr.mxu0 0.0
    %684 = vmatpush1.msra.mxu0 0.0
    %685 = vmatprep.subr.mxu0 0.0
    %686 = vmatpush1.msra.mxu0 0.0
    %687 = vmatprep.mubr.f32.mxu0 0.0
    %688 = vmatmul.mubr.f32.gmra.mrb[0].mxu0 %v516
    %v689 = vpop.f32.mrb[0].mxu0
    %v690 = vadd.f32 %v494, %v689
    %v691 = vpop.f32.mrb[0].mxu0
    %v692 = vadd.f32 %v494, %v691
    %693 = vmatprep.mubr.f32.mxu0 0.0
    %694 = vmatmul.mubr.f32.gmra.mrb[0].mxu0 %v519
    %v695 = vpop.f32.mrb[0].mxu0
    %v696 = vadd.f32 %v499, %v695
    %v697 = vpop.f32.mrb[0].mxu0
    %v698 = vadd.f32 %v499, %v697
    %699 = vmatprep.mubr.f32.mxu0 0.0
    %700 = vmatmul.mubr.f32.gmra.mrb[0].mxu0 %v522
    %v701 = vpop.f32.mrb[0].mxu0
    %v702 = vadd.f32 %v504, %v701
    %v703 = vpop.f32.mrb[0].mxu0
    %v704 = vadd.f32 %v504, %v703
    %705 = vmatprep.mubr.f32.mxu0 0.0
    %706 = vmatmul.mubr.f32.gmra.mrb[0].mxu0 %v525
    %v707 = vpop.f32.mrb[0].mxu0
    %v708 = vadd.f32 %v509, %v707
    %v709 = vpop.f32.mrb[0].mxu0
    %v710 = vadd.f32 %v509, %v709
    %711 = vmatprep.mubr.f32.mxu0 0.0
    %712 = vmatmul.mubr.f32.gmra.mrb[0].mxu0 %v528
    %v713 = vpop.f32.mrb[0].mxu0
    %v714 = vpop.f32.mrb[0].mxu0
    %715 = vdwg.mxu0
    %v716 = vtanh.pop %v597
    %v717 = vtanh.pop %v599
    %v718 = vtanh.pop %v690
    %v719 = vtanh.pop %v692
    %v720 = vtanh.pop %v603
    %v721 = vtanh.pop %v605
    %v722 = vtanh.pop %v696
    %v723 = vtanh.pop %v698
    %v724 = vtanh.pop %v609
    %v725 = vtanh.pop %v611
    %v726 = vtanh.pop %v702
    %v727 = vtanh.pop %v704
    %v728 = vtanh.pop %v615
    %v729 = vtanh.pop %v617
    %v730 = vtanh.pop %v708
    %v731 = vtanh.pop %v710
    %v732 = vld [vmem:[%s3] sm:$0xff]
    %v733 = vld [vmem:[%s3 + $0x8] sm:$0xff]
    %v734 = vld [vmem:[%s3 + $0x10] sm:$0xff]
    %v735 = vld [vmem:[%s3 + $0x18] sm:$0xff]
    %v736 = vld [vmem:[%s4] sm:$0xff]
    %v737 = vld [vmem:[%s4 + $0x8] sm:$0xff]
    %v738 = vld [vmem:[%s4 + $0x10] sm:$0xff]
    %v739 = vld [vmem:[%s4 + $0x18] sm:$0xff]
    %741 = vset.pattern.permute.xlu0 0
    %742 = vperm.xlu0 %741, %v736
    %v743 = vpop.permute.xlu0 %742
    %746 = vset.pattern.permute.xlu0 0
    %747 = vperm.xlu0 %746, %v737
    %v748 = vpop.permute.xlu0 %747
    %751 = vset.pattern.permute.xlu0 0
    %752 = vperm.xlu0 %751, %v738
    %v753 = vpop.permute.xlu0 %752
    %756 = vset.pattern.permute.xlu0 0
    %757 = vperm.xlu0 %756, %v739
    %v758 = vpop.permute.xlu0 %757
    %vm760 = vcmask 261120
    %v762 = vsel %vm760, %v732, 0
    %v765 = vsel %vm760, %v733, 0
    %v768 = vsel %vm760, %v734, 0
    %v771 = vsel %vm760, %v735, 0
    %773 = vmatprep.subr.mxu0 %v717
    %774 = vmatpush1.msra.mxu0 %v716
    %775 = vmatprep.subr.mxu0 %v721
    %776 = vmatpush1.msra.mxu0 %v720
    %777 = vmatprep.subr.mxu0 %v725
    %778 = vmatpush1.msra.mxu0 %v724
    %779 = vmatprep.subr.mxu0 %v729
    %780 = vmatpush1.msra.mxu0 %v728
    %781 = vmatprep.subr.mxu0 0.0
    %782 = vmatpush1.msra.mxu0 0.0
    %783 = vmatprep.subr.mxu0 0.0
    %784 = vmatpush1.msra.mxu0 0.0
    %785 = vmatprep.subr.mxu0 0.0
    %786 = vmatpush1.msra.mxu0 0.0
    %787 = vmatprep.subr.mxu0 0.0
    %788 = vmatpush1.msra.mxu0 0.0
    %789 = vmatprep.subr.mxu0 0.0
    %790 = vmatpush1.msra.mxu0 0.0
    %791 = vmatprep.subr.mxu0 0.0
    %792 = vmatpush1.msra.mxu0 0.0
    %793 = vmatprep.subr.mxu0 0.0
    %794 = vmatpush1.msra.mxu0 0.0
    %795 = vmatprep.subr.mxu0 0.0
    %796 = vmatpush1.msra.mxu0 0.0
    %797 = vmatprep.subr.mxu0 0.0
    %798 = vmatpush1.msra.mxu0 0.0
    %799 = vmatprep.subr.mxu0 0.0
    %800 = vmatpush1.msra.mxu0 0.0
    %801 = vmatprep.subr.mxu0 0.0
    %802 = vmatpush1.msra.mxu0 0.0
    %803 = vmatprep.subr.mxu0 0.0
    %804 = vmatpush1.msra.mxu0 0.0
    %805 = vmatprep.subr.mxu0 0.0
    %806 = vmatpush1.msra.mxu0 0.0
    %807 = vmatprep.subr.mxu0 0.0
    %808 = vmatpush1.msra.mxu0 0.0
    %809 = vmatprep.subr.mxu0 0.0
    %810 = vmatpush1.msra.mxu0 0.0
    %811 = vmatprep.subr.mxu0 0.0
    %812 = vmatpush1.msra.mxu0 0.0
    %813 = vmatprep.subr.mxu0 0.0
    %814 = vmatpush1.msra.mxu0 0.0
    %815 = vmatprep.subr.mxu0 0.0
    %816 = vmatpush1.msra.mxu0 0.0
    %817 = vmatprep.subr.mxu0 0.0
    %818 = vmatpush1.msra.mxu0 0.0
    %819 = vmatprep.subr.mxu0 0.0
    %820 = vmatpush1.msra.mxu0 0.0
    %821 = vmatprep.subr.mxu0 0.0
    %822 = vmatpush1.msra.mxu0 0.0
    %823 = vmatprep.subr.mxu0 0.0
    %824 = vmatpush1.msra.mxu0 0.0
    %825 = vmatprep.subr.mxu0 0.0
    %826 = vmatpush1.msra.mxu0 0.0
    %827 = vmatprep.subr.mxu0 0.0
    %828 = vmatpush1.msra.mxu0 0.0
    %829 = vmatprep.subr.mxu0 0.0
    %830 = vmatpush1.msra.mxu0 0.0
    %831 = vmatprep.subr.mxu0 0.0
    %832 = vmatpush1.msra.mxu0 0.0
    %833 = vmatprep.subr.mxu0 0.0
    %834 = vmatpush1.msra.mxu0 0.0
    %835 = vmatprep.subr.mxu0 0.0
    %836 = vmatpush1.msra.mxu0 0.0
    %837 = vmatprep.mubr.f32.mxu0 0.0
    %838 = vmatmul.mubr.f32.gmra.mrb[0].mxu0 %v762
    %v839 = vpop.f32.mrb[0].mxu0
    %v840 = vadd.f32 %v743, %v839
    %v841 = vpop.f32.mrb[0].mxu0
    %v842 = vadd.f32 %v743, %v841
    %843 = vmatprep.mubr.f32.mxu0 0.0
    %844 = vmatmul.mubr.f32.gmra.mrb[0].mxu0 %v765
    %v845 = vpop.f32.mrb[0].mxu0
    %v846 = vadd.f32 %v748, %v845
    %v847 = vpop.f32.mrb[0].mxu0
    %v848 = vadd.f32 %v748, %v847
    %849 = vmatprep.mubr.f32.mxu0 0.0
    %850 = vmatmul.mubr.f32.gmra.mrb[0].mxu0 %v768
    %v851 = vpop.f32.mrb[0].mxu0
    %v852 = vadd.f32 %v753, %v851
    %v853 = vpop.f32.mrb[0].mxu0
    %v854 = vadd.f32 %v753, %v853
    %855 = vmatprep.mubr.f32.mxu0 0.0
    %856 = vmatmul.mubr.f32.gmra.mrb[0].mxu0 %v771
    %v857 = vpop.f32.mrb[0].mxu0
    %v858 = vadd.f32 %v758, %v857
    %v859 = vpop.f32.mrb[0].mxu0
    %v860 = vadd.f32 %v758, %v859
    %861 = vdwg.mxu0
    %862 = vmatprep.subr.mxu0 %v719
    %863 = vmatpush1.msra.mxu0 %v718
    %864 = vmatprep.subr.mxu0 %v723
    %865 = vmatpush1.msra.mxu0 %v722
    %866 = vmatprep.subr.mxu0 %v727
    %867 = vmatpush1.msra.mxu0 %v726
    %868 = vmatprep.subr.mxu0 %v731
    %869 = vmatpush1.msra.mxu0 %v730
    %870 = vmatprep.subr.mxu0 0.0
    %871 = vmatpush1.msra.mxu0 0.0
    %872 = vmatprep.subr.mxu0 0.0
    %873 = vmatpush1.msra.mxu0 0.0
    %874 = vmatprep.subr.mxu0 0.0
    %875 = vmatpush1.msra.mxu0 0.0
    %876 = vmatprep.subr.mxu0 0.0
    %877 = vmatpush1.msra.mxu0 0.0
    %878 = vmatprep.subr.mxu0 0.0
    %879 = vmatpush1.msra.mxu0 0.0
    %880 = vmatprep.subr.mxu0 0.0
    %881 = vmatpush1.msra.mxu0 0.0
    %882 = vmatprep.subr.mxu0 0.0
    %883 = vmatpush1.msra.mxu0 0.0
    %884 = vmatprep.subr.mxu0 0.0
    %885 = vmatpush1.msra.mxu0 0.0
    %886 = vmatprep.subr.mxu0 0.0
    %887 = vmatpush1.msra.mxu0 0.0
    %888 = vmatprep.subr.mxu0 0.0
    %889 = vmatpush1.msra.mxu0 0.0
    %890 = vmatprep.subr.mxu0 0.0
    %891 = vmatpush1.msra.mxu0 0.0
    %892 = vmatprep.subr.mxu0 0.0
    %893 = vmatpush1.msra.mxu0 0.0
    %894 = vmatprep.subr.mxu0 0.0
    %895 = vmatpush1.msra.mxu0 0.0
    %896 = vmatprep.subr.mxu0 0.0
    %897 = vmatpush1.msra.mxu0 0.0
    %898 = vmatprep.subr.mxu0 0.0
    %899 = vmatpush1.msra.mxu0 0.0
    %900 = vmatprep.subr.mxu0 0.0
    %901 = vmatpush1.msra.mxu0 0.0
    %902 = vmatprep.subr.mxu0 0.0
    %903 = vmatpush1.msra.mxu0 0.0
    %904 = vmatprep.subr.mxu0 0.0
    %905 = vmatpush1.msra.mxu0 0.0
    %906 = vmatprep.subr.mxu0 0.0
    %907 = vmatpush1.msra.mxu0 0.0
    %908 = vmatprep.subr.mxu0 0.0
    %909 = vmatpush1.msra.mxu0 0.0
    %910 = vmatprep.subr.mxu0 0.0
    %911 = vmatpush1.msra.mxu0 0.0
    %912 = vmatprep.subr.mxu0 0.0
    %913 = vmatpush1.msra.mxu0 0.0
    %914 = vmatprep.subr.mxu0 0.0
    %915 = vmatpush1.msra.mxu0 0.0
    %916 = vmatprep.subr.mxu0 0.0
    %917 = vmatpush1.msra.mxu0 0.0
    %918 = vmatprep.subr.mxu0 0.0
    %919 = vmatpush1.msra.mxu0 0.0
    %920 = vmatprep.subr.mxu0 0.0
    %921 = vmatpush1.msra.mxu0 0.0
    %922 = vmatprep.subr.mxu0 0.0
    %923 = vmatpush1.msra.mxu0 0.0
    %924 = vmatprep.subr.mxu0 0.0
    %925 = vmatpush1.msra.mxu0 0.0
    %926 = vmatprep.mubr.f32.mxu0 0.0
    %927 = vmatmul.mubr.f32.gmra.mrb[0].mxu0 %v762
    %v928 = vpop.f32.mrb[0].mxu0
    %v929 = vadd.f32 %v743, %v928
    %v930 = vpop.f32.mrb[0].mxu0
    %v931 = vadd.f32 %v743, %v930
    %932 = vmatprep.mubr.f32.mxu0 0.0
    %933 = vmatmul.mubr.f32.gmra.mrb[0].mxu0 %v765
    %v934 = vpop.f32.mrb[0].mxu0
    %v935 = vadd.f32 %v748, %v934
    %v936 = vpop.f32.mrb[0].mxu0
    %v937 = vadd.f32 %v748, %v936
    %938 = vmatprep.mubr.f32.mxu0 0.0
    %939 = vmatmul.mubr.f32.gmra.mrb[0].mxu0 %v768
    %v940 = vpop.f32.mrb[0].mxu0
    %v941 = vadd.f32 %v753, %v940
    %v942 = vpop.f32.mrb[0].mxu0
    %v943 = vadd.f32 %v753, %v942
    %944 = vmatprep.mubr.f32.mxu0 0.0
    %945 = vmatmul.mubr.f32.gmra.mrb[0].mxu0 %v771
    %v946 = vpop.f32.mrb[0].mxu0
    %v947 = vadd.f32 %v758, %v946
    %v948 = vpop.f32.mrb[0].mxu0
    %v949 = vadd.f32 %v758, %v948
    %950 = vdwg.mxu0
    %v951 = vtanh.pop %v840
    %v952 = vtanh.pop %v842
    %v953 = vtanh.pop %v929
    %v954 = vtanh.pop %v931
    %v955 = vtanh.pop %v846
    %v956 = vtanh.pop %v848
    %v957 = vtanh.pop %v935
    %v958 = vtanh.pop %v937
    %v959 = vtanh.pop %v852
    %v960 = vtanh.pop %v854
    %v961 = vtanh.pop %v941
    %v962 = vtanh.pop %v943
    %v963 = vtanh.pop %v858
    %v964 = vtanh.pop %v860
    %v965 = vtanh.pop %v947
    %v966 = vtanh.pop %v949
    %s967 = scalar_lea.vmem %s3, 32
    %v968 = vld [vmem:[%s967] sm:$0xff]
    %v969 = vld [vmem:[%s967 + $0x8] sm:$0xff]
    %v970 = vld [vmem:[%s967 + $0x10] sm:$0xff]
    %v971 = vld [vmem:[%s967 + $0x18] sm:$0xff]
    %s972 = scalar_lea.vmem %s4, 32
    %v973 = vld [vmem:[%s972] sm:$0xff]
    %v974 = vld [vmem:[%s972 + $0x8] sm:$0xff]
    %v975 = vld [vmem:[%s972 + $0x10] sm:$0xff]
    %v976 = vld [vmem:[%s972 + $0x18] sm:$0xff]
    %978 = vset.pattern.permute.xlu0 0
    %979 = vperm.xlu0 %978, %v973
    %v980 = vpop.permute.xlu0 %979
    %983 = vset.pattern.permute.xlu0 0
    %984 = vperm.xlu0 %983, %v974
    %v985 = vpop.permute.xlu0 %984
    %988 = vset.pattern.permute.xlu0 0
    %989 = vperm.xlu0 %988, %v975
    %v990 = vpop.permute.xlu0 %989
    %993 = vset.pattern.permute.xlu0 0
    %994 = vperm.xlu0 %993, %v976
    %v995 = vpop.permute.xlu0 %994
    %v998 = vsel %vm760, %v968, 0
    %v1001 = vsel %vm760, %v969, 0
    %v1004 = vsel %vm760, %v970, 0
    %v1007 = vsel %vm760, %v971, 0
    %1009 = vmatprep.subr.mxu0 %v952
    %1010 = vmatpush1.msra.mxu0 %v951
    %1011 = vmatprep.subr.mxu0 %v956
    %1012 = vmatpush1.msra.mxu0 %v955
    %1013 = vmatprep.subr.mxu0 %v960
    %1014 = vmatpush1.msra.mxu0 %v959
    %1015 = vmatprep.subr.mxu0 %v964
    %1016 = vmatpush1.msra.mxu0 %v963
    %1017 = vmatprep.subr.mxu0 0.0
    %1018 = vmatpush1.msra.mxu0 0.0
    %1019 = vmatprep.subr.mxu0 0.0
    %1020 = vmatpush1.msra.mxu0 0.0
    %1021 = vmatprep.subr.mxu0 0.0
    %1022 = vmatpush1.msra.mxu0 0.0
    %1023 = vmatprep.subr.mxu0 0.0
    %1024 = vmatpush1.msra.mxu0 0.0
    %1025 = vmatprep.subr.mxu0 0.0
    %1026 = vmatpush1.msra.mxu0 0.0
    %1027 = vmatprep.subr.mxu0 0.0
    %1028 = vmatpush1.msra.mxu0 0.0
    %1029 = vmatprep.subr.mxu0 0.0
    %1030 = vmatpush1.msra.mxu0 0.0
    %1031 = vmatprep.subr.mxu0 0.0
    %1032 = vmatpush1.msra.mxu0 0.0
    %1033 = vmatprep.subr.mxu0 0.0
    %1034 = vmatpush1.msra.mxu0 0.0
    %1035 = vmatprep.subr.mxu0 0.0
    %1036 = vmatpush1.msra.mxu0 0.0
    %1037 = vmatprep.subr.mxu0 0.0
    %1038 = vmatpush1.msra.mxu0 0.0
    %1039 = vmatprep.subr.mxu0 0.0
    %1040 = vmatpush1.msra.mxu0 0.0
    %1041 = vmatprep.subr.mxu0 0.0
    %1042 = vmatpush1.msra.mxu0 0.0
    %1043 = vmatprep.subr.mxu0 0.0
    %1044 = vmatpush1.msra.mxu0 0.0
    %1045 = vmatprep.subr.mxu0 0.0
    %1046 = vmatpush1.msra.mxu0 0.0
    %1047 = vmatprep.subr.mxu0 0.0
    %1048 = vmatpush1.msra.mxu0 0.0
    %1049 = vmatprep.subr.mxu0 0.0
    %1050 = vmatpush1.msra.mxu0 0.0
    %1051 = vmatprep.subr.mxu0 0.0
    %1052 = vmatpush1.msra.mxu0 0.0
    %1053 = vmatprep.subr.mxu0 0.0
    %1054 = vmatpush1.msra.mxu0 0.0
    %1055 = vmatprep.subr.mxu0 0.0
    %1056 = vmatpush1.msra.mxu0 0.0
    %1057 = vmatprep.subr.mxu0 0.0
    %1058 = vmatpush1.msra.mxu0 0.0
    %1059 = vmatprep.subr.mxu0 0.0
    %1060 = vmatpush1.msra.mxu0 0.0
    %1061 = vmatprep.subr.mxu0 0.0
    %1062 = vmatpush1.msra.mxu0 0.0
    %1063 = vmatprep.subr.mxu0 0.0
    %1064 = vmatpush1.msra.mxu0 0.0
    %1065 = vmatprep.subr.mxu0 0.0
    %1066 = vmatpush1.msra.mxu0 0.0
    %1067 = vmatprep.subr.mxu0 0.0
    %1068 = vmatpush1.msra.mxu0 0.0
    %1069 = vmatprep.subr.mxu0 0.0
    %1070 = vmatpush1.msra.mxu0 0.0
    %1071 = vmatprep.subr.mxu0 0.0
    %1072 = vmatpush1.msra.mxu0 0.0
    %1073 = vmatprep.mubr.f32.mxu0 0.0
    %1074 = vmatmul.mubr.f32.gmra.mrb[0].mxu0 %v998
    %v1075 = vpop.f32.mrb[0].mxu0
    %v1076 = vadd.f32 %v980, %v1075
    %v1077 = vpop.f32.mrb[0].mxu0
    %v1078 = vadd.f32 %v980, %v1077
    %1079 = vmatprep.mubr.f32.mxu0 0.0
    %1080 = vmatmul.mubr.f32.gmra.mrb[0].mxu0 %v1001
    %v1081 = vpop.f32.mrb[0].mxu0
    %v1082 = vadd.f32 %v985, %v1081
    %v1083 = vpop.f32.mrb[0].mxu0
    %v1084 = vadd.f32 %v985, %v1083
    %1085 = vmatprep.mubr.f32.mxu0 0.0
    %1086 = vmatmul.mubr.f32.gmra.mrb[0].mxu0 %v1004
    %v1087 = vpop.f32.mrb[0].mxu0
    %v1088 = vadd.f32 %v990, %v1087
    %v1089 = vpop.f32.mrb[0].mxu0
    %v1090 = vadd.f32 %v990, %v1089
    %1091 = vmatprep.mubr.f32.mxu0 0.0
    %1092 = vmatmul.mubr.f32.gmra.mrb[0].mxu0 %v1007
    %v1093 = vpop.f32.mrb[0].mxu0
    %v1094 = vadd.f32 %v995, %v1093
    %v1095 = vpop.f32.mrb[0].mxu0
    %v1096 = vadd.f32 %v995, %v1095
    %1097 = vdwg.mxu0
    %1098 = vmatprep.subr.mxu0 %v954
    %1099 = vmatpush1.msra.mxu0 %v953
    %1100 = vmatprep.subr.mxu0 %v958
    %1101 = vmatpush1.msra.mxu0 %v957
    %1102 = vmatprep.subr.mxu0 %v962
    %1103 = vmatpush1.msra.mxu0 %v961
    %1104 = vmatprep.subr.mxu0 %v966
    %1105 = vmatpush1.msra.mxu0 %v965
    %1106 = vmatprep.subr.mxu0 0.0
    %1107 = vmatpush1.msra.mxu0 0.0
    %1108 = vmatprep.subr.mxu0 0.0
    %1109 = vmatpush1.msra.mxu0 0.0
    %1110 = vmatprep.subr.mxu0 0.0
    %1111 = vmatpush1.msra.mxu0 0.0
    %1112 = vmatprep.subr.mxu0 0.0
    %1113 = vmatpush1.msra.mxu0 0.0
    %1114 = vmatprep.subr.mxu0 0.0
    %1115 = vmatpush1.msra.mxu0 0.0
    %1116 = vmatprep.subr.mxu0 0.0
    %1117 = vmatpush1.msra.mxu0 0.0
    %1118 = vmatprep.subr.mxu0 0.0
    %1119 = vmatpush1.msra.mxu0 0.0
    %1120 = vmatprep.subr.mxu0 0.0
    %1121 = vmatpush1.msra.mxu0 0.0
    %1122 = vmatprep.subr.mxu0 0.0
    %1123 = vmatpush1.msra.mxu0 0.0
    %1124 = vmatprep.subr.mxu0 0.0
    %1125 = vmatpush1.msra.mxu0 0.0
    %1126 = vmatprep.subr.mxu0 0.0
    %1127 = vmatpush1.msra.mxu0 0.0
    %1128 = vmatprep.subr.mxu0 0.0
    %1129 = vmatpush1.msra.mxu0 0.0
    %1130 = vmatprep.subr.mxu0 0.0
    %1131 = vmatpush1.msra.mxu0 0.0
    %1132 = vmatprep.subr.mxu0 0.0
    %1133 = vmatpush1.msra.mxu0 0.0
    %1134 = vmatprep.subr.mxu0 0.0
    %1135 = vmatpush1.msra.mxu0 0.0
    %1136 = vmatprep.subr.mxu0 0.0
    %1137 = vmatpush1.msra.mxu0 0.0
    %1138 = vmatprep.subr.mxu0 0.0
    %1139 = vmatpush1.msra.mxu0 0.0
    %1140 = vmatprep.subr.mxu0 0.0
    %1141 = vmatpush1.msra.mxu0 0.0
    %1142 = vmatprep.subr.mxu0 0.0
    %1143 = vmatpush1.msra.mxu0 0.0
    %1144 = vmatprep.subr.mxu0 0.0
    %1145 = vmatpush1.msra.mxu0 0.0
    %1146 = vmatprep.subr.mxu0 0.0
    %1147 = vmatpush1.msra.mxu0 0.0
    %1148 = vmatprep.subr.mxu0 0.0
    %1149 = vmatpush1.msra.mxu0 0.0
    %1150 = vmatprep.subr.mxu0 0.0
    %1151 = vmatpush1.msra.mxu0 0.0
    %1152 = vmatprep.subr.mxu0 0.0
    %1153 = vmatpush1.msra.mxu0 0.0
    %1154 = vmatprep.subr.mxu0 0.0
    %1155 = vmatpush1.msra.mxu0 0.0
    %1156 = vmatprep.subr.mxu0 0.0
    %1157 = vmatpush1.msra.mxu0 0.0
    %1158 = vmatprep.subr.mxu0 0.0
    %1159 = vmatpush1.msra.mxu0 0.0
    %1160 = vmatprep.subr.mxu0 0.0
    %1161 = vmatpush1.msra.mxu0 0.0
    %1162 = vmatprep.mubr.f32.mxu0 0.0
    %1163 = vmatmul.mubr.f32.gmra.mrb[0].mxu0 %v998
    %v1164 = vpop.f32.mrb[0].mxu0
    %v1165 = vadd.f32 %v980, %v1164
    %v1166 = vpop.f32.mrb[0].mxu0
    %v1167 = vadd.f32 %v980, %v1166
    %1168 = vmatprep.mubr.f32.mxu0 0.0
    %1169 = vmatmul.mubr.f32.gmra.mrb[0].mxu0 %v1001
    %v1170 = vpop.f32.mrb[0].mxu0
    %v1171 = vadd.f32 %v985, %v1170
    %v1172 = vpop.f32.mrb[0].mxu0
    %v1173 = vadd.f32 %v985, %v1172
    %1174 = vmatprep.mubr.f32.mxu0 0.0
    %1175 = vmatmul.mubr.f32.gmra.mrb[0].mxu0 %v1004
    %v1176 = vpop.f32.mrb[0].mxu0
    %v1177 = vadd.f32 %v990, %v1176
    %v1178 = vpop.f32.mrb[0].mxu0
    %v1179 = vadd.f32 %v990, %v1178
    %1180 = vmatprep.mubr.f32.mxu0 0.0
    %1181 = vmatmul.mubr.f32.gmra.mrb[0].mxu0 %v1007
    %v1182 = vpop.f32.mrb[0].mxu0
    %v1183 = vadd.f32 %v995, %v1182
    %v1184 = vpop.f32.mrb[0].mxu0
    %v1185 = vadd.f32 %v995, %v1184
    %1186 = vdwg.mxu0
    %v1187 = vtanh.pop %v1076
    %v1188 = vtanh.pop %v1078
    %v1189 = vtanh.pop %v1165
    %v1190 = vtanh.pop %v1167
    %v1191 = vtanh.pop %v1082
    %v1192 = vtanh.pop %v1084
    %v1193 = vtanh.pop %v1171
    %v1194 = vtanh.pop %v1173
    %v1195 = vtanh.pop %v1088
    %v1196 = vtanh.pop %v1090
    %v1197 = vtanh.pop %v1177
    %v1198 = vtanh.pop %v1179
    %v1199 = vtanh.pop %v1094
    %v1200 = vtanh.pop %v1096
    %v1201 = vtanh.pop %v1183
    %v1202 = vtanh.pop %v1185
    %1203 = vst [vmem:[#allocation5] sm:$0xff] %v1187
    %1204 = vst [vmem:[#allocation5 + $0x8] sm:$0xff] %v1188
    %1205 = vst [vmem:[#allocation5 + $0x10] sm:$0xff] %v1189
    %1206 = vst [vmem:[#allocation5 + $0x18] sm:$0xff] %v1190
    %1207 = vst [vmem:[#allocation5 + $0x20] sm:$0xff] %v1191
    %1208 = vst [vmem:[#allocation5 + $0x28] sm:$0xff] %v1192
    %1209 = vst [vmem:[#allocation5 + $0x30] sm:$0xff] %v1193
    %1210 = vst [vmem:[#allocation5 + $0x38] sm:$0xff] %v1194
    %1211 = vst [vmem:[#allocation5 + $0x40] sm:$0xff] %v1195
    %1212 = vst [vmem:[#allocation5 + $0x48] sm:$0xff] %v1196
    %1213 = vst [vmem:[#allocation5 + $0x50] sm:$0xff] %v1197
    %1214 = vst [vmem:[#allocation5 + $0x58] sm:$0xff] %v1198
    %1215 = vst [vmem:[#allocation5 + $0x60] sm:$0xff] %v1199
    %1216 = vst [vmem:[#allocation5 + $0x68] sm:$0xff] %v1200
    %1217 = vst [vmem:[#allocation5 + $0x70] sm:$0xff] %v1201
    %1218 = vst [vmem:[#allocation5 + $0x78] sm:$0xff] %v1202
    // Predicated region
    $region34: #{encoder_layer_nn_fb.1} parent=1 // pred_check
      _
    $region35: #{encoder_layer_nn_fb.1} parent=1 // pred_check_branch
      %1220 = sbr.rel (0) target = $region37
    $region36: #{encoder_layer_nn_fb.1} parent=1 // pred_region
      %s1222 = ssub.s32 2048, 2048
      %1223 = vsyncadd [#allocation4], %s1222
      %s1224 = sshll.u32 [#allocation5], 4
      %s1225 = int_to_ptr.vmem [resolvable:$true] %s1224
      %1230 = dma.vmem_to_hbm [thread:$0]  %s1225, 2048, %s7, [#allocation4], 512, 512, 32
    $region37: #{encoder_layer_nn_fb.1} parent=1 // pred_fallthru
      _
    // Predicated region
    $region38: #{encoder_layer_nn_fb.1} parent=1 // pred_check
      _
    $region39: #{encoder_layer_nn_fb.1} parent=1 // pred_check_branch
      %1232 = sbr.rel (0) target = $region41
    $region40: #{encoder_layer_nn_fb.1} parent=1 // pred_region
      %1233 = dma.done [#allocation4], 2048
    $region41: #{encoder_layer_nn_fb.1} parent=1 // pred_fallthru
      _
    %1234 = vsyncpa [#allocation3], 1
    %1235 = vsyncpa [#allocation4], 1

</llo_original>
